<compile_context>
chip_gen: v7x
topology: tpu7x:2x2x1
jax: 0.10.0
libtpu: 0.0.40
codegen_flags: <defaults>
</compile_context>

<pallas_src>
import functools

import jax
import jax.numpy as jnp
from jax.experimental import pallas as pl
from jax.experimental.pallas import tpu as pltpu


def _mixup_ls_ce_kernel(logits_ref, t1_ref, t2_ref, lam_ref, out_ref, *,
                        epsilon, num_classes, n_total, tile_n):
    i = pl.program_id(0)

    x = logits_ref[...].astype(jnp.float32)                    # (tn, c_pad) f32
    tn, c_pad = x.shape

    # Stable per-row log-sum-exp (padded lanes hold dtype-min -> exp == 0).
    m = jnp.max(x, axis=-1, keepdims=True)                     # (tn, 1)
    lse = jnp.log(jnp.sum(jnp.exp(x - m), axis=-1, keepdims=True))

    # Fused mixup + label-smoothing weights, one weighted reduction:
    #   w = eps/C + (1-eps)*(lam*[c==t1] + (1-lam)*[c==t2]);  sum_c w = 1
    #   per-row loss = (m + lse) - sum_c w * x
    lam = lam_ref[0, 0]
    cls_iota = jax.lax.broadcasted_iota(jnp.int32, (1, c_pad), 1)   # (1, C)
    w = (jnp.where(cls_iota == t1_ref[...], lam * (1.0 - epsilon), 0.0)
         + jnp.where(cls_iota == t2_ref[...], (1.0 - lam) * (1.0 - epsilon), 0.0))
    if c_pad == num_classes:
        w = w + (epsilon / float(num_classes))
    else:
        # Mask the uniform smoothing weight off the padded classes.
        w = w + jnp.where(cls_iota < num_classes,
                          epsilon / float(num_classes), 0.0)
    wx = jnp.sum(w * x, axis=-1, keepdims=True)                 # (tn, 1)
    per_row = (m + lse) - wx                                    # (tn, 1)

    # Ragged last tile: only emit the row mask if the batch doesn't divide.
    if n_total % tile_n != 0:
        row = jax.lax.broadcasted_iota(jnp.int32, (tn, 1), 0) + i * tile_n
        per_row = jnp.where(row < n_total, per_row, 0.0)

    # Lane-dense (1, 128) partial-sum store; wrapper reads lane 0 per tile.
    out_ref[...] = jnp.sum(per_row) * jnp.ones((1, 128), jnp.float32)


def _choose_tile_n(n, c_pad, itemsize):
    # Per-row VMEM cost: double-buffered input tile + ~3 f32 full-tile temps
    # (f32 upcast, exp(x-m), w*x) that get materialized at these sizes.
    per_row = c_pad * (2 * itemsize + 3 * 4)
    budget = 36 * 1024 * 1024           # fits v7x's 64 MiB VMEM with headroom
    rows = max(16, budget // per_row)
    rows = (rows // 16) * 16            # 16-row aligned: valid for f32 and bf16
    if rows >= n:
        return n                        # single tile == full array dims
    return rows


def cross_entropy_mixup_label_smooth(logits, target1, target2, lam,
                                     *, epsilon=0.1, tile_n=None):
    """logits: (N, C) float (bf16/f32); target1/target2: (N,) int; lam: scalar."""
    n, c = logits.shape

    # Pad classes to a lane multiple so partial-lane reductions are well defined.
    c_pad = ((c + 127) // 128) * 128
    if c_pad != c:
        pad_val = float(jnp.finfo(logits.dtype).min)
        logits = jnp.pad(logits, ((0, 0), (0, c_pad - c)),
                         constant_values=pad_val)

    itemsize = logits.dtype.itemsize
    if tile_n is None:
        tile_n = _choose_tile_n(n, c_pad, itemsize)
    tile_n = min(tile_n, n)
    if tile_n < n:
        align = 16 if itemsize < 4 else 8   # bf16 packs (16,128), f32 (8,128)
        assert tile_n % align == 0, (
            f"tile_n must be a multiple of {align} when tiling")
    num_tiles = pl.cdiv(n, tile_n)

    t1 = target1.astype(jnp.int32).reshape(n, 1)
    t2 = target2.astype(jnp.int32).reshape(n, 1)
    lam_arr = jnp.asarray(lam, dtype=jnp.float32).reshape(1, 1)

    kernel = functools.partial(_mixup_ls_ce_kernel,
                               epsilon=float(epsilon), num_classes=c,
                               n_total=n, tile_n=tile_n)

    # VMEM budget derived from actual need (v7x 64 MiB-safe).
    in_tile_bytes = tile_n * c_pad * itemsize
    f32_tile_bytes = tile_n * c_pad * 4
    vmem_limit = 2 * in_tile_bytes + 3 * f32_tile_bytes + 6 * 1024 * 1024
    vmem_limit = int(min(max(vmem_limit, 16 * 1024 * 1024), 60 * 1024 * 1024))

    partials = pl.pallas_call(
        kernel,
        out_shape=jax.ShapeDtypeStruct((1, 128 * num_tiles), jnp.float32),
        grid_spec=pltpu.PrefetchScalarGridSpec(
            num_scalar_prefetch=0,
            grid=(num_tiles,),
            in_specs=[
                pl.BlockSpec((tile_n, c_pad), lambda i: (i, 0)),  # logits tile
                pl.BlockSpec((tile_n, 1), lambda i: (i, 0)),      # target1 tile
                pl.BlockSpec((tile_n, 1), lambda i: (i, 0)),      # target2 tile
                pl.BlockSpec(memory_space=pltpu.MemorySpace.SMEM),  # lam scalar
            ],
            out_specs=pl.BlockSpec((1, 128), lambda i: (0, i)),   # per-tile sums
        ),
        compiler_params=pltpu.CompilerParams(
            dimension_semantics=("parallel",),   # independent per-tile partials
            vmem_limit_bytes=vmem_limit,
        ),
    )(logits, t1, t2, lam_arr)

    # Each tile's partial sum is replicated across its 128 output lanes.
    per_tile = partials.reshape(num_tiles, 128)[:, 0]
    return jnp.sum(per_tile) / float(n)


def _reference(logits, target1, target2, lam, epsilon=0.1):
    """Pure-JAX reference mirroring the PyTorch module (reduction='mean')."""
    x = logits.astype(jnp.float32)
    n, c = x.shape
    logp = jax.nn.log_softmax(x, axis=1)

    def ce(t):
        onehot = jax.nn.one_hot(t, c, dtype=jnp.float32)
        tgt = (1.0 - epsilon) * onehot + epsilon / c
        return jnp.mean(jnp.sum(-tgt * logp, axis=1))

    return lam * ce(target1) + (1.0 - lam) * ce(target2)


if __name__ == "__main__":
    EPSILON = 0.1
    key = jax.random.PRNGKey(0)

    # Test 1: f32, multi-tile accumulation with a ragged last tile.
    # batch=20, classes=128, tile_n=8 -> grid of 3 tiles (8 + 8 + 4 rows).
    N, C = 20, 128
    k1, k2, k3 = jax.random.split(key, 3)
    logits = jax.random.normal(k1, (N, C), dtype=jnp.float32)
    target1 = jax.random.randint(k2, (N,), 0, C, dtype=jnp.int32)
    target2 = jax.random.randint(k3, (N,), 0, C, dtype=jnp.int32)
    lam = 0.7

    loss = cross_entropy_mixup_label_smooth(logits, target1, target2, lam,
                                            epsilon=EPSILON, tile_n=8)
    loss = jax.block_until_ready(loss)
    ref = _reference(logits, target1, target2, lam, epsilon=EPSILON)
    assert jnp.allclose(loss, ref, rtol=1e-5, atol=1e-5), (loss, ref)

    # Test 2: bf16 logits, non-multiple-of-128 class count (padded path),
    # auto tile size (single tile), exercising the masked uniform weight.
    N2, C2 = 32, 300
    k4, k5, k6 = jax.random.split(jax.random.PRNGKey(1), 3)
    logits2 = jax.random.normal(k4, (N2, C2), dtype=jnp.bfloat16)
    t1_2 = jax.random.randint(k5, (N2,), 0, C2, dtype=jnp.int32)
    t2_2 = jax.random.randint(k6, (N2,), 0, C2, dtype=jnp.int32)
    lam2 = 0.35

    loss2 = cross_entropy_mixup_label_smooth(logits2, t1_2, t2_2, lam2,
                                             epsilon=EPSILON)
    loss2 = jax.block_until_ready(loss2)
    ref2 = _reference(logits2, t1_2, t2_2, lam2, epsilon=EPSILON)
    assert jnp.allclose(loss2, ref2, rtol=1e-4, atol=1e-4), (loss2, ref2)

    print("KERNEL_OK")
</pallas_src>

<mosaic_0001>
module attributes {stable_mosaic.version = 11 : i64} {
  func.func @_mixup_ls_ce_kernel(%arg0: i32, %arg1: memref<8x128xf32, #tpu.memory_space<vmem>>, %arg2: memref<8x1xi32, #tpu.memory_space<vmem>>, %arg3: memref<8x1xi32, #tpu.memory_space<vmem>>, %arg4: memref<1x1xf32, #tpu.memory_space<smem>>, %arg5: memref<1x128xf32, #tpu.memory_space<vmem>>) attributes {dimension_semantics = [#tpu.dimension_semantics<parallel>], iteration_bounds = array<i64: 3>, scalar_prefetch = 0 : i64, scratch_operands = 0 : i64, tpu.core_type = #tpu.core_type<tc>, window_params = [{transform_indices = @transform_0, window_bounds = array<i64: 8, 128>}, {transform_indices = @transform_1, window_bounds = array<i64: 8, 1>}, {transform_indices = @transform_2, window_bounds = array<i64: 8, 1>}, {transform_indices = @transform_3, window_bounds = array<i64: 1, 1>}, {transform_indices = @transform_4, window_bounds = array<i64: 1, 128>}]} {
    %c0 = arith.constant 0 : index
    %c0_0 = arith.constant 0 : index
    %0 = vector.load %arg1[%c0, %c0_0] : memref<8x128xf32, #tpu.memory_space<vmem>>, vector<8x128xf32>
    %cst = arith.constant dense<0xFF800000> : vector<8xf32>
    %1 = vector.multi_reduction <maximumf>, %0, %cst [1] : vector<8x128xf32> to vector<8xf32>
    %2 = vector.shape_cast %1 : vector<8xf32> to vector<8x1xf32>
    %3 = vector.broadcast %2 : vector<8x1xf32> to vector<8x128xf32>
    %4 = arith.subf %0, %3 : vector<8x128xf32>
    %5 = math.exp %4 : vector<8x128xf32>
    %cst_1 = arith.constant dense<0.000000e+00> : vector<8xf32>
    %6 = vector.multi_reduction <add>, %5, %cst_1 [1] : vector<8x128xf32> to vector<8xf32>
    %7 = vector.shape_cast %6 : vector<8xf32> to vector<8x1xf32>
    %8 = math.log %7 : vector<8x1xf32>
    %c0_2 = arith.constant 0 : index
    %c0_3 = arith.constant 0 : index
    %9 = memref.load %arg4[%c0_2, %c0_3] : memref<1x1xf32, #tpu.memory_space<smem>>
    %10 = tpu.iota {dimensions = array<i32: 1>} : vector<1x128xi32>
    %c0_4 = arith.constant 0 : index
    %c0_5 = arith.constant 0 : index
    %11 = vector.load %arg2[%c0_4, %c0_5] : memref<8x1xi32, #tpu.memory_space<vmem>>, vector<8x1xi32>
    %12 = vector.broadcast %10 : vector<1x128xi32> to vector<8x128xi32>
    %13 = vector.broadcast %11 : vector<8x1xi32> to vector<8x128xi32>
    %14 = arith.cmpi eq, %12, %13 : vector<8x128xi32>
    %cst_6 = arith.constant 0.899999976 : f32
    %15 = arith.mulf %9, %cst_6 : f32
    %cst_7 = arith.constant 0.000000e+00 : f32
    %16 = vector.broadcast %15 : f32 to vector<8x128xf32>
    %17 = vector.broadcast %cst_7 : f32 to vector<8x128xf32>
    %18 = arith.select %14, %16, %17 : vector<8x128xi1>, vector<8x128xf32>
    %c0_8 = arith.constant 0 : index
    %c0_9 = arith.constant 0 : index
    %19 = vector.load %arg3[%c0_8, %c0_9] : memref<8x1xi32, #tpu.memory_space<vmem>>, vector<8x1xi32>
    %20 = vector.broadcast %10 : vector<1x128xi32> to vector<8x128xi32>
    %21 = vector.broadcast %19 : vector<8x1xi32> to vector<8x128xi32>
    %22 = arith.cmpi eq, %20, %21 : vector<8x128xi32>
    %cst_10 = arith.constant 1.000000e+00 : f32
    %23 = arith.subf %cst_10, %9 : f32
    %cst_11 = arith.constant 0.899999976 : f32
    %24 = arith.mulf %23, %cst_11 : f32
    %cst_12 = arith.constant 0.000000e+00 : f32
    %25 = vector.broadcast %24 : f32 to vector<8x128xf32>
    %26 = vector.broadcast %cst_12 : f32 to vector<8x128xf32>
    %27 = arith.select %22, %25, %26 : vector<8x128xi1>, vector<8x128xf32>
    %28 = arith.addf %18, %27 : vector<8x128xf32>
    %cst_13 = arith.constant 7.812500e-04 : f32
    %29 = vector.broadcast %cst_13 : f32 to vector<8x128xf32>
    %30 = arith.addf %28, %29 : vector<8x128xf32>
    %31 = arith.mulf %30, %0 : vector<8x128xf32>
    %cst_14 = arith.constant dense<0.000000e+00> : vector<8xf32>
    %32 = vector.multi_reduction <add>, %31, %cst_14 [1] : vector<8x128xf32> to vector<8xf32>
    %33 = vector.shape_cast %32 : vector<8xf32> to vector<8x1xf32>
    %34 = arith.addf %2, %8 : vector<8x1xf32>
    %35 = arith.subf %34, %33 : vector<8x1xf32>
    %36 = tpu.iota {dimensions = array<i32: 0>} : vector<8x1xi32>
    %c8_i32 = arith.constant 8 : i32
    %37 = arith.muli %arg0, %c8_i32 : i32
    %38 = vector.broadcast %37 : i32 to vector<8x1xi32>
    %39 = arith.addi %36, %38 : vector<8x1xi32>
    %c20_i32 = arith.constant 20 : i32
    %40 = vector.broadcast %c20_i32 : i32 to vector<8x1xi32>
    %41 = arith.cmpi slt, %39, %40 : vector<8x1xi32>
    %cst_15 = arith.constant 0.000000e+00 : f32
    %42 = vector.broadcast %cst_15 : f32 to vector<8x1xf32>
    %43 = arith.select %41, %35, %42 : vector<8x1xi1>, vector<8x1xf32>
    %44 = vector.shape_cast %43 : vector<8x1xf32> to vector<1x8x1xf32>
    %cst_16 = arith.constant dense<0.000000e+00> : vector<1xf32>
    %45 = vector.multi_reduction <add>, %44, %cst_16 [1, 2] : vector<1x8x1xf32> to vector<1xf32>
    %46 = vector.shape_cast %45 : vector<1xf32> to vector<1x1x1xf32>
    %47 = vector.extract %46[0, 0, 0] : f32 from vector<1x1x1xf32>
    %cst_17 = arith.constant 1.000000e+00 : f32
    %48 = vector.broadcast %cst_17 : f32 to vector<1x128xf32>
    %49 = vector.broadcast %47 : f32 to vector<1x128xf32>
    %50 = arith.mulf %49, %48 : vector<1x128xf32>
    %c0_18 = arith.constant 0 : index
    %c0_19 = arith.constant 0 : index
    %51 = vector.load %arg5[%c0_18, %c0_19] : memref<1x128xf32, #tpu.memory_space<vmem>>, vector<1x128xf32>
    tpu.vector_store %arg5[%c0_18, %c0_19], %50 {strides = array<i32>} : memref<1x128xf32, #tpu.memory_space<vmem>>, vector<1x128xf32>,
    return
  }
  func.func @transform_0(%arg0: i32) -> (i32, i32) {
    %c0_i32 = arith.constant 0 : i32
    %c0_i32_0 = arith.constant 0 : i32
    return %arg0, %c0_i32 : i32, i32
  }
  func.func @transform_1(%arg0: i32) -> (i32, i32) {
    %c0_i32 = arith.constant 0 : i32
    %c0_i32_0 = arith.constant 0 : i32
    return %arg0, %c0_i32 : i32, i32
  }
  func.func @transform_2(%arg0: i32) -> (i32, i32) {
    %c0_i32 = arith.constant 0 : i32
    %c0_i32_0 = arith.constant 0 : i32
    return %arg0, %c0_i32 : i32, i32
  }
  func.func @transform_3(%arg0: i32) -> (i32, i32) {
    %c0_i32 = arith.constant 0 : i32
    %c0_i32_0 = arith.constant 0 : i32
    %c0_i32_1 = arith.constant 0 : i32
    return %c0_i32, %c0_i32_0 : i32, i32
  }
  func.func @transform_4(%arg0: i32) -> (i32, i32) {
    %c0_i32 = arith.constant 0 : i32
    %c0_i32_0 = arith.constant 0 : i32
    return %c0_i32, %arg0 : i32, i32
  }
}

</mosaic_0001>

<llo_original>
// kernel: tpu_custom_call.1
$region0: #{tpu_custom_call.1}
  #allocation0 [shape = 'u32[]', space=smem, size = 0x4, offset = 0x4, fixed_abs, tag = 'smem constant byte address 0x4 - core index']
  #allocation1 [shape = 'u32[144,128]{1,0:T(1,128)}', space=vmem, size = 0x12000, scoped, tag = 'internal scratch']
  #allocation2 [shape = 'f32[1,1]{1,0:T(1,128)S(6)}', space=smem, size = 0x200, scoped, tag = 'scoped memory for tpu_custom_call.1']
  %s0 = inlined_call_operand.vmem [shape: f32[20,128], index: 0, kind: input, shape index: {}]
  %s1 = inlined_call_operand.vmem [shape: s32[20,1], index: 1, kind: input, shape index: {}]
  %s2 = inlined_call_operand.vmem [shape: s32[20,1], index: 2, kind: input, shape index: {}]
  %s3 = inlined_call_operand.<no memory space> [shape: f32[1,1], index: 3, kind: input, shape index: {}]
  %s4 = inlined_call_operand.hbm [shape: f32[1,384], index: 4, kind: output, shape index: {}]
  %s5 = sld [smem:[#allocation0]]
  $region49: #{tpu_custom_call.1} parent=0
    _
  %s7 = ssub.s32 1, %s5
  %s8 = scalar_select 0, %s7, %s5
  %9 = sst [smem:[#allocation2]] %s3
  $region1: #{tpu_custom_call.1} parent=0
    #allocation3 [shape = 'u8[1024]{0}', space=vmem, size = 0x400, scoped, tag = 'output window, operand 0']
    #allocation4 [shape = 's32[2]{0}', space=sflag, size = 0x8, scoped, tag = 'scoped memory for tpu_custom_call.1']
    %10 = vsyncpa [#allocation4], 0
    %s11 = scalar_lea.sflag [#allocation4], 1
    %12 = vsyncpa %s11, 0
    loop: start=0, step=1, limit=5
    $region2: #{tpu_custom_call.1} parent=1 // loop_pre_header
      _
    $region3: #{tpu_custom_call.1} parent=1 // loop_header
      %s14 = sphi 0, %s18
      %p15 = scmp.ge.s32.totalorder %s14, 5
      %s24 = sphi 0, %s26
      %s27 = sphi 0, %s24
      %s28 = sphi 0, %s27
      %s44 = sphi 0, %s28
      %s50 = sphi 0, %s52
      %s53 = sphi 0, %s50
      %s54 = sphi 0, %s53
      %s70 = sphi 0, %s54
      %s76 = sphi 0, %s78
      %s79 = sphi 0, %s76
      %s80 = sphi 0, %s79
      %s96 = sphi 0, %s80
      %s100 = sphi 0, %s100
      %s102 = sphi 0, %s100
      %s103 = sphi 0, %s102
      %s117 = sphi 0, %s103
      %s123 = sphi 0, %s125
      %s126 = sphi 0, %s123
      %s127 = sphi 0, %s126
      %s143 = sphi 0, %s127
    $region4: #{tpu_custom_call.1} parent=1 // loop_header_branch
      %17 = sbr.rel (%p15) target = $region8
    $region5: #{tpu_custom_call.1} parent=1 // loop_body
      %s19 = ssub.s32 %s14, 1
      %s20 = ssub.s32 %s14, 2
      %s21 = sadd.s32 %s14, 1
      %s22 = ssub.s32 %s14, %s21
      %p23 = scmp.eq.s32.totalorder %s22, 0
      %s25 = sadd.s32 %s24, 1
      %s26 = scalar_select %p23, %s24, %s25
      %p29 = pneg %p23
      %p30 = scmp.eq.s32.totalorder %s14, 2
      %p31 = por %p29, %p30
      %p32 = scmp.ne.s32.totalorder %s24, %s27
      %p33 = scmp.eq.s32.totalorder %s14, 0
      %p34 = por %p32, %p33
      %p35 = scmp.ne.s32.totalorder %s24, %s27
      %p36 = scmp.eq.s32.totalorder %s19, 2
      %p37 = por %p35, %p36
      %p38 = scmp.ne.s32.totalorder %s27, %s28
      %p39 = scmp.eq.s32.totalorder %s19, 0
      %p40 = por %p38, %p39
      %p41 = scmp.ne.s32.totalorder %s27, %s28
      %p42 = scmp.eq.s32.totalorder %s20, 2
      %p43 = por %p41, %p42
      %p45 = scmp.ne.s32.totalorder %s28, %s44
      %p46 = scmp.eq.s32.totalorder %s20, 0
      %p47 = por %p45, %p46
      %s48 = ssub.s32 %s14, %s21
      %p49 = scmp.eq.s32.totalorder %s48, 0
      %s51 = sadd.s32 %s50, 1
      %s52 = scalar_select %p49, %s50, %s51
      %p55 = pneg %p49
      %p56 = scmp.eq.s32.totalorder %s14, 2
      %p57 = por %p55, %p56
      %p58 = scmp.ne.s32.totalorder %s50, %s53
      %p59 = scmp.eq.s32.totalorder %s14, 0
      %p60 = por %p58, %p59
      %p61 = scmp.ne.s32.totalorder %s50, %s53
      %p62 = scmp.eq.s32.totalorder %s19, 2
      %p63 = por %p61, %p62
      %p64 = scmp.ne.s32.totalorder %s53, %s54
      %p65 = scmp.eq.s32.totalorder %s19, 0
      %p66 = por %p64, %p65
      %p67 = scmp.ne.s32.totalorder %s53, %s54
      %p68 = scmp.eq.s32.totalorder %s20, 2
      %p69 = por %p67, %p68
      %p71 = scmp.ne.s32.totalorder %s54, %s70
      %p72 = scmp.eq.s32.totalorder %s20, 0
      %p73 = por %p71, %p72
      %s74 = ssub.s32 %s14, %s21
      %p75 = scmp.eq.s32.totalorder %s74, 0
      %s77 = sadd.s32 %s76, 1
      %s78 = scalar_select %p75, %s76, %s77
      %p81 = pneg %p75
      %p82 = scmp.eq.s32.totalorder %s14, 2
      %p83 = por %p81, %p82
      %p84 = scmp.ne.s32.totalorder %s76, %s79
      %p85 = scmp.eq.s32.totalorder %s14, 0
      %p86 = por %p84, %p85
      %p87 = scmp.ne.s32.totalorder %s76, %s79
      %p88 = scmp.eq.s32.totalorder %s19, 2
      %p89 = por %p87, %p88
      %p90 = scmp.ne.s32.totalorder %s79, %s80
      %p91 = scmp.eq.s32.totalorder %s19, 0
      %p92 = por %p90, %p91
      %p93 = scmp.ne.s32.totalorder %s79, %s80
      %p94 = scmp.eq.s32.totalorder %s20, 2
      %p95 = por %p93, %p94
      %p97 = scmp.ne.s32.totalorder %s80, %s96
      %p98 = scmp.eq.s32.totalorder %s20, 0
      %p99 = por %p97, %p98
      %s101 = sadd.s32 %s100, 1
      %p104 = scmp.eq.s32.totalorder %s14, 2
      %p105 = scmp.ne.s32.totalorder %s100, %s102
      %p106 = scmp.eq.s32.totalorder %s14, 0
      %p107 = por %p105, %p106
      %p108 = scmp.ne.s32.totalorder %s100, %s102
      %p109 = scmp.eq.s32.totalorder %s19, 2
      %p110 = por %p108, %p109
      %p111 = scmp.ne.s32.totalorder %s102, %s103
      %p112 = scmp.eq.s32.totalorder %s19, 0
      %p113 = por %p111, %p112
      %p114 = scmp.ne.s32.totalorder %s102, %s103
      %p115 = scmp.eq.s32.totalorder %s20, 2
      %p116 = por %p114, %p115
      %p118 = scmp.ne.s32.totalorder %s103, %s117
      %p119 = scmp.eq.s32.totalorder %s20, 0
      %p120 = por %p118, %p119
      %s121 = ssub.s32 %s14, %s21
      %p122 = scmp.eq.s32.totalorder %s121, 0
      %s124 = sadd.s32 %s123, 1
      %s125 = scalar_select %p122, %s123, %s124
      %p128 = pneg %p122
      %p129 = scmp.eq.s32.totalorder %s14, 2
      %p130 = por %p128, %p129
      %p131 = scmp.ne.s32.totalorder %s123, %s126
      %p132 = scmp.eq.s32.totalorder %s14, 0
      %p133 = por %p131, %p132
      %p134 = scmp.ne.s32.totalorder %s123, %s126
      %p135 = scmp.eq.s32.totalorder %s19, 2
      %p136 = por %p134, %p135
      %p137 = scmp.ne.s32.totalorder %s126, %s127
      %p138 = scmp.eq.s32.totalorder %s19, 0
      %p139 = por %p137, %p138
      %p140 = scmp.ne.s32.totalorder %s126, %s127
      %p141 = scmp.eq.s32.totalorder %s20, 2
      %p142 = por %p140, %p141
      %p144 = scmp.ne.s32.totalorder %s127, %s143
      %p145 = scmp.eq.s32.totalorder %s20, 0
      %p146 = por %p144, %p145
      %p147 = scmp.le.s32.totalorder 1, %s14
      %p148 = scmp.lt.s32.totalorder %s14, 4
      %p149 = pnand %p147, %p148
      %p150 = pneg %p149
      // Predicated region
      $region9: #{tpu_custom_call.1} parent=5 // pred_check
        _
      $region10: #{tpu_custom_call.1} parent=5 // pred_check_branch
        %152 = sbr.rel (%p149) target = $region12
      $region11: #{tpu_custom_call.1} parent=5 // pred_region
        %s153 = ssub.s32 %s14, 1
        // Predicated region
        $region13: #{tpu_custom_call.1} parent=11 // pred_check
          %p154 = pneg %p113
        $region14: #{tpu_custom_call.1} parent=11 // pred_check_branch
          %156 = sbr.rel (%p154) target = $region16
        $region15: #{tpu_custom_call.1} parent=11 // pred_region
          _
        $region16: #{tpu_custom_call.1} parent=11 // pred_fallthru
          _
      $region12: #{tpu_custom_call.1} parent=5 // pred_fallthru
        _
      %p157 = scmp.lt.s32.totalorder %s14, 3
      // Predicated region
      $region17: #{tpu_custom_call.1} parent=5 // pred_check
        %p158 = pneg %p157
      $region18: #{tpu_custom_call.1} parent=5 // pred_check_branch
        %160 = sbr.rel (%p158) target = $region20
      $region19: #{tpu_custom_call.1} parent=5 // pred_region
        // Predicated region
        $region21: #{tpu_custom_call.1} parent=19 // pred_check
          %p161 = pneg %p34
        $region22: #{tpu_custom_call.1} parent=19 // pred_check_branch
          %163 = sbr.rel (%p161) target = $region24
        $region23: #{tpu_custom_call.1} parent=19 // pred_region
          %p164 = scmp.lt.s32.totalorder %s14, 2
          %s165 = scalar_select %p164, %s14, 2
          %s166 = smul.addr %s165, 8
          %s167 = scalar_lea.vmem %s0, %s166
        $region24: #{tpu_custom_call.1} parent=19 // pred_fallthru
          _
        // Predicated region
        $region25: #{tpu_custom_call.1} parent=19 // pred_check
          %p168 = pneg %p60
        $region26: #{tpu_custom_call.1} parent=19 // pred_check_branch
          %170 = sbr.rel (%p168) target = $region28
        $region27: #{tpu_custom_call.1} parent=19 // pred_region
          %p171 = scmp.lt.s32.totalorder %s14, 2
          %s172 = scalar_select %p171, %s14, 2
          %s173 = smul.addr %s172, 8
          %s174 = scalar_lea.vmem %s1, %s173
        $region28: #{tpu_custom_call.1} parent=19 // pred_fallthru
          _
        // Predicated region
        $region29: #{tpu_custom_call.1} parent=19 // pred_check
          %p175 = pneg %p86
        $region30: #{tpu_custom_call.1} parent=19 // pred_check_branch
          %177 = sbr.rel (%p175) target = $region32
        $region31: #{tpu_custom_call.1} parent=19 // pred_region
          %p178 = scmp.lt.s32.totalorder %s14, 2
          %s179 = scalar_select %p178, %s14, 2
          %s180 = smul.addr %s179, 8
          %s181 = scalar_lea.vmem %s2, %s180
        $region32: #{tpu_custom_call.1} parent=19 // pred_fallthru
          _
      $region20: #{tpu_custom_call.1} parent=5 // pred_fallthru
        _
      %p182 = scmp.le.s32.totalorder 1, %s14
      %p183 = scmp.lt.s32.totalorder %s14, 4
      %p184 = pnand %p182, %p183
      %p185 = pneg %p184
      // Predicated region
      $region33: #{tpu_custom_call.1} parent=5 // pred_check
        _
      $region34: #{tpu_custom_call.1} parent=5 // pred_check_branch
        %187 = sbr.rel (%p184) target = $region36
      $region35: #{tpu_custom_call.1} parent=5 // pred_region
        %s188 = ssub.s32 %s14, 1
        %p189 = scmp.lt.s32.totalorder %s19, 2
        %s190 = scalar_select %p189, %s19, 2
        %s191 = smul.addr %s190, 8
        %s192 = scalar_lea.vmem %s0, %s191
        %p193 = pneg %p40
        %p194 = pneg %p37
        %p195 = scmp.lt.s32.totalorder %s19, 2
        %s196 = scalar_select %p195, %s19, 2
        %s197 = smul.addr %s196, 8
        %s198 = scalar_lea.vmem %s1, %s197
        %p199 = pneg %p66
        %p200 = pneg %p63
        %p201 = scmp.lt.s32.totalorder %s19, 2
        %s202 = scalar_select %p201, %s19, 2
        %s203 = smul.addr %s202, 8
        %s204 = scalar_lea.vmem %s2, %s203
        %p205 = pneg %p92
        %p206 = pneg %p89
        %p207 = pneg %p113
        %p208 = pneg %p110
        %p209 = pneg %p139
        %p210 = pneg %p136
        %s211 = sand.u32 %s126, 1
        %s212 = scalar_lea.sflag [#allocation4], %s211
        %s213 = sand.u32 %s126, 1
        %s214 = scalar_lea.vmem [#allocation3], %s213
        %p215 = scmp.lt.s32.totalorder %s19, 2
        %s216 = scalar_select %p215, %s19, 2
        %s217 = smul.addr %s216, 8
        %s218 = scalar_lea.vmem %s0, %s217
        %p219 = scmp.lt.s32.totalorder %s19, 2
        %s220 = scalar_select %p219, %s19, 2
        %s221 = smul.addr %s220, 8
        %s222 = scalar_lea.vmem %s1, %s221
        %p223 = scmp.lt.s32.totalorder %s19, 2
        %s224 = scalar_select %p223, %s19, 2
        %s225 = smul.addr %s224, 8
        %s226 = scalar_lea.vmem %s2, %s225
        %v227 = vld [vmem:[%s218] sm:$0xff]
        %228 = vmax.xlane.f32.xlu0 %v227
        %v229 = vpop.xlane.xlu0 %228
        %v230 = vsub.f32 %v227, %v229
        %v231 = vmul.f32 %v230, 1.442695
        %v232 = vpow.pop %v231
        %233 = vadd.xlane.f32.xlu0 %v232
        %v234 = vpop.xlane.xlu0 %233
        %v235 = vlog2.pop %v234
        %v236 = vmul.f32 %v235, 0.6931472
        %s237 = sld [smem:[#allocation2]]
        %v238 = vlaneseq
        %v239 = vand.u32 %v238, 127
        %v240 = vld [vmem:[%s222] sm:$0xff]
        %241 = vset.pattern.permute.xlu0 0
        %242 = vperm.xlu0 %241, %v240
        %v243 = vpop.permute.xlu0 %242
        %vm244 = vcmp.eq.s32.totalorder %v239, %v243
        %s245 = smul.f32 %s237, 0.9
        %v246 = vstv %s245
        %v247 = vsel %vm244, %v246, 0.0
        %v248 = vld [vmem:[%s226] sm:$0xff]
        %249 = vset.pattern.permute.xlu0 0
        %250 = vperm.xlu0 %249, %v248
        %v251 = vpop.permute.xlu0 %250
        %vm252 = vcmp.eq.s32.totalorder %v239, %v251
        %s253 = ssub.f32 1.0, %s237
        %s254 = smul.f32 %s253, 0.9
        %v255 = vstv %s254
        %v256 = vsel %vm252, %v255, 0.0
        %v257 = vadd.f32 %v247, %v256
        %v258 = vadd.f32 %v257, 0.00078125
        %v259 = vmul.f32 %v258, %v227
        %260 = vadd.xlane.f32.xlu0 %v259
        %v261 = vpop.xlane.xlu0 %260
        %v262 = vadd.f32 %v229, %v236
        %v263 = vsub.f32 %v262, %v261
        %v264 = vlaneseq
        %v265 = vshrl.u32 %v264, 7
        %s266 = smul.u32 %s19, 8
        %v267 = vstv %s266
        %v268 = vadd.s32 %v265, %v267
        %vm269 = vcmp.lt.s32.totalorder %v268, 20
        %v270 = vsel %vm269, %v263, 0.0
        %vm271 = vcmask 7168
        %v272 = vsel %vm271, %v270, 0.0
        %273 = vadd.xlane.f32.xlu0 %v272
        %v274 = vpop.xlane.xlu0 %273
        %v275 = vrot.slane %v274, 4
        %v276 = vadd.f32 %v274, %v275
        %v277 = vrot.slane %v276, 2
        %v278 = vadd.f32 %v276, %v277
        %v279 = vrot.slane %v278, 1
        %v280 = vadd.f32 %v278, %v279
        %s281 = vtos %v280
        %v282 = vstv %s281
        %283 = vst [vmem:[%s214] sm:$0x1] %v282
        %s284 = sand.u32 %s126, 1
        %s285 = scalar_lea.sflag [#allocation4], %s284
        %s286 = sand.u32 %s126, 1
        %s287 = scalar_lea.vmem [#allocation3], %s286
        // Predicated region
        $region37: #{tpu_custom_call.1} parent=35 // pred_check
          %p288 = pneg %p136
        $region38: #{tpu_custom_call.1} parent=35 // pred_check_branch
          %290 = sbr.rel (%p288) target = $region40
        $region39: #{tpu_custom_call.1} parent=35 // pred_region
          %s292 = ssub.s32 16, 16
          %293 = vsyncadd %s285, %s292
          %s294 = smul.addr %s19, 16
          %s295 = scalar_lea.hbm %s4, %s294
          %s297 = sshll.u32 %s287, 4
          %s298 = int_to_ptr.vmem [resolvable:$true] %s297
          %300 = dma.vmem_to_hbm [thread:$0]  %s298, 16, %s295, %s285
        $region40: #{tpu_custom_call.1} parent=35 // pred_fallthru
          _
      $region36: #{tpu_custom_call.1} parent=5 // pred_fallthru
        _
      %p301 = scmp.le.s32.totalorder 2, %s14
      // Predicated region
      $region41: #{tpu_custom_call.1} parent=5 // pred_check
        %p302 = pneg %p301
      $region42: #{tpu_custom_call.1} parent=5 // pred_check_branch
        %304 = sbr.rel (%p302) target = $region44
      $region43: #{tpu_custom_call.1} parent=5 // pred_region
        %s305 = ssub.s32 %s14, 2
        // Predicated region
        $region45: #{tpu_custom_call.1} parent=43 // pred_check
          %p306 = pneg %p142
        $region46: #{tpu_custom_call.1} parent=43 // pred_check_branch
          %308 = sbr.rel (%p306) target = $region48
        $region47: #{tpu_custom_call.1} parent=43 // pred_region
          %s309 = sand.u32 %s127, 1
          %s310 = scalar_lea.sflag [#allocation4], %s309
          %s311 = sand.u32 %s127, 1
          %s312 = scalar_lea.vmem [#allocation3], %s311
          %313 = dma.done %s310, 16
        $region48: #{tpu_custom_call.1} parent=43 // pred_fallthru
          _
      $region44: #{tpu_custom_call.1} parent=5 // pred_fallthru
        _
    $region6: #{tpu_custom_call.1} parent=1 // loop_footer
      %s18 = sadd.s32 1, %s14
    $region7: #{tpu_custom_call.1} parent=1 // loop_footer_branch
      %13 = sbr.rel target = $region3
    $region8: #{tpu_custom_call.1} parent=1 // loop_exit
      _
    %314 = vsyncpa [#allocation4], 1
    %s315 = scalar_lea.sflag [#allocation4], 1
    %316 = vsyncpa %s315, 1

</llo_original>
